<compile_context>
chip_gen: v5e
topology: v5e:2x2
jax: 0.10.0
libtpu: 0.0.40
codegen_flags: <defaults>
</compile_context>

<pallas_src>
import jax
import jax.numpy as jnp
from jax.experimental import pallas as pl
from jax.experimental.pallas import tpu as pltpu


LANE = 1024              # lane-dense last dim: 8 * 128 lanes
TILE_ROWS = 512          # 512 x 1024 x 4 B = 2 MiB per tile per array
PALLAS_MIN_BYTES = 1 << 20   # below ~1 MiB, pure jnp beats kernel launch overhead


def znet_kernel(theta_ref, x_ref, o_ref):
    # theta_ref is the whole (1,) parameter in SMEM; x_ref/o_ref are
    # lane-dense (tile_rows, 1024) VMEM tiles.
    scale = 2.0 * theta_ref[0]          # one scalar mul on the scalar unit
    o_ref[...] = x_ref[...] * scale


def model5_forward(t, x, theta, *, force_pallas=False):
    """Pallas implementation of Model5.forward(t, x) = 2 * theta * x."""
    del t  # unused, matching the reference semantics
    theta = theta.astype(x.dtype)

    nbytes = x.size * x.dtype.itemsize
    if nbytes < PALLAS_MIN_BYTES and not force_pallas:
        # Tiny input: Pallas launch overhead dominates; let XLA fuse it.
        return (2.0 * theta[0]) * x

    orig_shape = x.shape
    total = x.size
    flat = x.reshape(-1)

    rows = pl.cdiv(total, LANE)
    padded = rows * LANE
    if padded != total:
        # TODO(synk): only hit when x.size % 1024 != 0; jnp.pad copies the
        # whole array once (unavoidable to get a lane-dense 2-D view).
        flat = jnp.pad(flat, (0, padded - total))
    x2d = flat.reshape(rows, LANE)

    # Single full-array block for small inputs; otherwise 2 MiB tiles with
    # Pallas-handled (masked) partial edge blocks.
    tile_rows = min(TILE_ROWS, rows)
    grid = (pl.cdiv(rows, tile_rows),)

    out2d = pl.pallas_call(
        znet_kernel,
        out_shape=jax.ShapeDtypeStruct((rows, LANE), x.dtype),
        grid=grid,
        in_specs=[
            pl.BlockSpec(memory_space=pltpu.SMEM),              # theta scalar
            pl.BlockSpec((tile_rows, LANE), lambda i: (i, 0)),  # x tiles
        ],
        out_specs=pl.BlockSpec((tile_rows, LANE), lambda i: (i, 0)),
        compiler_params=pltpu.CompilerParams(
            dimension_semantics=("parallel",)),
    )(theta, x2d)

    out = out2d.reshape(-1)
    if padded != total:
        out = out[:total]
    return out.reshape(orig_shape)


if __name__ == "__main__":
    key = jax.random.PRNGKey(0)
    kt, kx, kx2, kx3 = jax.random.split(key, 4)

    # Deterministic parameter init matching ZNet.__init__: theta = [-1.0]
    theta = jnp.array([-1.0], dtype=jnp.float32)

    # --- Small shape from the module spec: (B, N) = (8, 32), t is (B, 1). ---
    B, N = 8, 32
    t_small = jax.random.normal(kt, (B, 1), dtype=jnp.float32)
    x_small = jax.random.normal(kx, (B, N), dtype=jnp.float32)

    out_small = model5_forward(t_small, x_small, theta)          # jnp fast path
    out_small_pl = model5_forward(t_small, x_small, theta,
                                  force_pallas=True)             # Pallas path
    jax.block_until_ready((out_small, out_small_pl))

    ref_small = 2.0 * theta[0] * x_small
    assert out_small.shape == x_small.shape
    assert jnp.allclose(out_small, ref_small, atol=1e-6), "small jnp path mismatch"
    assert jnp.allclose(out_small_pl, ref_small, atol=1e-6), "small pallas path mismatch"

    # --- Larger, aligned shape: no padding, multi-tile pipelined path. ---
    M, K = 512, 2048   # 4 MiB f32 -> rows=1024, tile_rows=512, grid=(2,)
    x_big = jax.random.normal(kx2, (M, K), dtype=jnp.float32)
    t_big = jnp.zeros((M, 1), dtype=jnp.float32)

    out_big = model5_forward(t_big, x_big, theta)
    jax.block_until_ready(out_big)

    ref_big = 2.0 * theta[0] * x_big
    assert out_big.shape == x_big.shape
    assert jnp.allclose(out_big, ref_big, atol=1e-6), "large pallas path mismatch"

    # --- Non-divisible shape: exercises the masked partial edge block. ---
    M2, K2 = 600, 2048  # rows = 1200 -> grid=(3,) with a partial last block
    x_odd = jax.random.normal(kx3, (M2, K2), dtype=jnp.float32)
    t_odd = jnp.zeros((M2, 1), dtype=jnp.float32)

    out_odd = model5_forward(t_odd, x_odd, theta)
    jax.block_until_ready(out_odd)

    ref_odd = 2.0 * theta[0] * x_odd
    assert out_odd.shape == x_odd.shape
    assert jnp.allclose(out_odd, ref_odd, atol=1e-6), "partial-block path mismatch"

    print("KERNEL_OK")
</pallas_src>

<mosaic_0001>
module attributes {stable_mosaic.version = 11 : i64} {
  func.func @znet_kernel(%arg0: i32, %arg1: memref<1xf32, #tpu.memory_space<smem>>, %arg2: memref<1x1024xf32, #tpu.memory_space<vmem>>, %arg3: memref<1x1024xf32, #tpu.memory_space<vmem>>) attributes {dimension_semantics = [#tpu.dimension_semantics<parallel>], iteration_bounds = array<i64: 1>, scalar_prefetch = 0 : i64, scratch_operands = 0 : i64, tpu.core_type = #tpu.core_type<tc>, window_params = [{transform_indices = @transform_0, window_bounds = array<i64: 1>}, {transform_indices = @transform_1, window_bounds = array<i64: 1, 1024>}, {transform_indices = @transform_2, window_bounds = array<i64: 1, 1024>}]} {
    %c0 = arith.constant 0 : index
    %0 = memref.load %arg1[%c0] : memref<1xf32, #tpu.memory_space<smem>>
    %cst = arith.constant 2.000000e+00 : f32
    %1 = arith.mulf %cst, %0 : f32
    %c0_0 = arith.constant 0 : index
    %c0_1 = arith.constant 0 : index
    %2 = vector.load %arg2[%c0_0, %c0_1] : memref<1x1024xf32, #tpu.memory_space<vmem>>, vector<1x1024xf32>
    %3 = vector.broadcast %1 : f32 to vector<1x1024xf32>
    %4 = arith.mulf %2, %3 : vector<1x1024xf32>
    %c0_2 = arith.constant 0 : index
    %c0_3 = arith.constant 0 : index
    %5 = vector.load %arg3[%c0_2, %c0_3] : memref<1x1024xf32, #tpu.memory_space<vmem>>, vector<1x1024xf32>
    tpu.vector_store %arg3[%c0_2, %c0_3], %4 {strides = array<i32>} : memref<1x1024xf32, #tpu.memory_space<vmem>>, vector<1x1024xf32>,
    return
  }
  func.func @transform_0(%arg0: i32) -> i32 {
    %c0_i32 = arith.constant 0 : i32
    %c0_i32_0 = arith.constant 0 : i32
    return %c0_i32 : i32
  }
  func.func @transform_1(%arg0: i32) -> (i32, i32) {
    %c0_i32 = arith.constant 0 : i32
    %c0_i32_0 = arith.constant 0 : i32
    return %arg0, %c0_i32 : i32, i32
  }
  func.func @transform_2(%arg0: i32) -> (i32, i32) {
    %c0_i32 = arith.constant 0 : i32
    %c0_i32_0 = arith.constant 0 : i32
    return %arg0, %c0_i32 : i32, i32
  }
}

</mosaic_0001>

<llo_original>
// kernel: tpu_custom_call.1
$region0: #{tpu_custom_call.1}
  #allocation0 [shape = 'u32[]', space=smem, size = 0x4, offset = 0x4, fixed_abs, tag = 'smem constant byte address 0x4 - core index']
  #allocation1 [shape = 'u32[72,128]{1,0:T(1,128)}', space=vmem, size = 0x9000, scoped, tag = 'internal scratch']
  #allocation2 [shape = 'f32[1]{0:T(128)S(6)}', space=smem, size = 0x200, scoped, tag = 'scoped memory for tpu_custom_call.1']
  %s0 = inlined_call_operand.<no memory space> [shape: f32[1], index: 0, kind: input, shape index: {}]
  %s1 = inlined_call_operand.hbm [shape: f32[1,1024], index: 1, kind: input, shape index: {}]
  %s2 = inlined_call_operand.hbm [shape: f32[1,1024], index: 2, kind: output, shape index: {}]
  %s3 = sld [smem:[#allocation0]]
  $region22: #{tpu_custom_call.1} parent=0
    _
  %s5 = ssub.s32 1, %s3
  %s6 = scalar_select 0, %s5, %s3
  %7 = sst [smem:[#allocation2]] %s0
  $region1: #{tpu_custom_call.1} parent=0
    #allocation3 [shape = 'u8[4096]{0}', space=vmem, size = 0x1000, scoped, tag = 'input window, operand 1, single buffered']
    #allocation4 [shape = 's32[1]{0}', space=sflag, size = 0x4, scoped, tag = 'scoped memory for tpu_custom_call.1']
    #allocation5 [shape = 's32[1]{0}', space=sflag, size = 0x4, scoped, tag = 'scoped memory for tpu_custom_call.1']
    #allocation6 [shape = 'u8[4096]{0}', space=vmem, size = 0x1000, scoped, tag = 'output window, operand 0, single buffered']
    %8 = vsyncpa [#allocation4], 0
    %9 = vsyncpa [#allocation5], 0
    // Predicated region
    $region2: #{tpu_custom_call.1} parent=1 // pred_check
      _
    $region3: #{tpu_custom_call.1} parent=1 // pred_check_branch
      %11 = sbr.rel (0) target = $region5
    $region4: #{tpu_custom_call.1} parent=1 // pred_region
      _
    $region5: #{tpu_custom_call.1} parent=1 // pred_fallthru
      _
    // Predicated region
    $region6: #{tpu_custom_call.1} parent=1 // pred_check
      _
    $region7: #{tpu_custom_call.1} parent=1 // pred_check_branch
      %13 = sbr.rel (0) target = $region9
    $region8: #{tpu_custom_call.1} parent=1 // pred_region
      %15 = vsyncadd [#allocation4], 0
      %s17 = sshll.u32 %s1, 4
      %s18 = int_to_ptr.hbm [resolvable:$true] %s17
      %s19 = sshll.u32 [#allocation3], 4
      %s20 = int_to_ptr.vmem [resolvable:$true] %s19
      %22 = dma.hbm_to_vmem [thread:$0]  %s18, 128, %s20, [#allocation4]
    $region9: #{tpu_custom_call.1} parent=1 // pred_fallthru
      _
    // Predicated region
    $region10: #{tpu_custom_call.1} parent=1 // pred_check
      _
    $region11: #{tpu_custom_call.1} parent=1 // pred_check_branch
      %24 = sbr.rel (0) target = $region13
    $region12: #{tpu_custom_call.1} parent=1 // pred_region
      %26 = dma.done [#allocation4], 128
    $region13: #{tpu_custom_call.1} parent=1 // pred_fallthru
      _
    %s27 = sld [smem:[#allocation2]]
    %s28 = smul.f32 %s27, 2.0
    %v29 = vld [vmem:[#allocation3] sm:$0xff]
    %v30 = vstv %s28
    %v31 = vmul.f32 %v29, %v30
    %32 = vst [vmem:[#allocation6] sm:$0xff] %v31
    // Predicated region
    $region14: #{tpu_custom_call.1} parent=1 // pred_check
      _
    $region15: #{tpu_custom_call.1} parent=1 // pred_check_branch
      %34 = sbr.rel (0) target = $region17
    $region16: #{tpu_custom_call.1} parent=1 // pred_region
      %36 = vsyncadd [#allocation5], 0
      %s38 = sshll.u32 [#allocation6], 4
      %s39 = int_to_ptr.vmem [resolvable:$true] %s38
      %s40 = sshll.u32 %s2, 4
      %s41 = int_to_ptr.hbm [resolvable:$true] %s40
      %43 = dma.vmem_to_hbm [thread:$0]  %s39, 128, %s41, [#allocation5]
    $region17: #{tpu_custom_call.1} parent=1 // pred_fallthru
      _
    // Predicated region
    $region18: #{tpu_custom_call.1} parent=1 // pred_check
      _
    $region19: #{tpu_custom_call.1} parent=1 // pred_check_branch
      %45 = sbr.rel (0) target = $region21
    $region20: #{tpu_custom_call.1} parent=1 // pred_region
      %47 = dma.done [#allocation5], 128
    $region21: #{tpu_custom_call.1} parent=1 // pred_fallthru
      _
    %48 = vsyncpa [#allocation4], 1
    %49 = vsyncpa [#allocation5], 1

</llo_original>
